<compile_context>
chip_gen: v6e
topology: v6e:2x2x1
jax: 0.10.0
libtpu: 0.0.40
codegen_flags: <defaults>
</compile_context>

<pallas_src>
import functools

import jax
import jax.numpy as jnp
from jax.experimental import pallas as pl
from jax.experimental.pallas import tpu as pltpu

W_CE = 0.7   # weight for nn.CrossEntropyLoss
W_NLL = 0.3  # weight for nn.NLLLoss (applied to flattened raw logits)


def _combined_loss_kernel(x_ref, t_ref, o_ref, acc_ref, *, S, tile_s):
    """One (b, s) grid step.

    x_ref : (C, tile_s)   logits slice, classes on sublanes, positions on lanes
    t_ref : (1, tile_s)   int32 targets for these positions
    o_ref : (1, 1)        per-batch partial sum of weighted losses
    acc_ref: (1, tile_s)  f32 lane-shaped running partial sums
    """
    s = pl.program_id(1)

    @pl.when(s == 0)
    def _():
        acc_ref[...] = jnp.zeros_like(acc_ref)

    x = x_ref[...].astype(jnp.float32)            # (C, tile_s)
    t = t_ref[...]                                # (1, tile_s) int32

    # Validity mask for the (possibly ragged) last tile along S.
    col = jax.lax.broadcasted_iota(jnp.int32, (1, tile_s), 1)
    valid = (s * tile_s + col) < S                # (1, tile_s) bool

    # Gather logits[t[n], n] with a one-hot select over the class (sublane) axis.
    cls = jax.lax.broadcasted_iota(jnp.int32, x.shape, 0)           # (C, tile_s)
    tgt_logit = jnp.sum(jnp.where(cls == t, x, 0.0),
                        axis=0, keepdims=True)                      # (1, tile_s)

    # Numerically stable logsumexp over the class axis.
    m = jnp.max(x, axis=0, keepdims=True)                           # (1, tile_s)
    lse = m + jnp.log(jnp.sum(jnp.exp(x - m), axis=0, keepdims=True))

    # Per-position weighted loss:  w_ce * (lse - x_t)  +  w_nll * (-x_t)
    row = W_CE * (lse - tgt_logit) + W_NLL * (-tgt_logit)           # (1, tile_s)

    acc_ref[...] += jnp.where(valid, row, 0.0)

    @pl.when(s == pl.num_programs(1) - 1)
    def _():
        # Single cross-lane reduce per batch element (epilogue only).
        o_ref[...] = jnp.sum(acc_ref[...], axis=-1, keepdims=True)  # (1, 1)


def _pick_tile_s(C, S, itemsize, vmem_limit_bytes):
    """Largest lane tile such that the double-buffered logits block fits VMEM."""
    budget = vmem_limit_bytes // 4          # logits double-buffer <= ~1/4 of limit
    per_col = 2 * C * itemsize              # 2 pipeline buffers, C rows per column
    max_cols = max(128, budget // per_col)
    if S <= max_cols:
        return int(S)                       # one block spans full S (no 128 rule)
    return int((max_cols // 128) * 128)     # lane-aligned tile, ragged tail masked


def combined_loss(logits, targets, *, vmem_limit_bytes=32 * 1024 * 1024):
    """logits: (B, C, S) float (any dtype), targets: (B, S) int -> scalar f32."""
    B, C, S = logits.shape
    N = B * S
    tile_s = _pick_tile_s(C, S, jnp.dtype(logits.dtype).itemsize, vmem_limit_bytes)
    num_s = pl.cdiv(S, tile_s)

    # Targets as (B, 1, S) so their block is a clean lane-dense (1, tile_s) slab.
    t3 = targets.reshape(B, 1, S).astype(jnp.int32)

    partials = pl.pallas_call(
        functools.partial(_combined_loss_kernel, S=S, tile_s=tile_s),
        out_shape=jax.ShapeDtypeStruct((B, 1, 1), jnp.float32),
        grid_spec=pltpu.PrefetchScalarGridSpec(
            num_scalar_prefetch=0,
            grid=(B, num_s),
            in_specs=[
                # Native NCW layout: classes -> sublanes, positions -> lanes.
                pl.BlockSpec((None, C, tile_s), lambda b, s: (b, 0, s)),
                pl.BlockSpec((None, 1, tile_s), lambda b, s: (b, 0, s)),
            ],
            out_specs=pl.BlockSpec((None, 1, 1), lambda b, s: (b, 0, 0)),
            scratch_shapes=[pltpu.VMEM((1, tile_s), jnp.float32)],
        ),
        compiler_params=pltpu.CompilerParams(
            dimension_semantics=("parallel", "arbitrary"),
            vmem_limit_bytes=vmem_limit_bytes,
        ),
    )(logits, t3)

    return jnp.sum(partials) / jnp.float32(N)


def _reference(logits, targets):
    """Pure-JAX reference matching the PyTorch forward semantics."""
    B, C, S = logits.shape
    x = jnp.transpose(logits, (0, 2, 1)).reshape(-1, C).astype(jnp.float32)
    t = targets.reshape(-1)
    logp = jax.nn.log_softmax(x, axis=-1)
    rows = jnp.arange(x.shape[0])
    ce = -jnp.mean(logp[rows, t])
    nll = -jnp.mean(x[rows, t])
    return W_CE * ce + W_NLL * nll


if __name__ == "__main__":
    # Small shapes implied by the forward: logits (B, num_classes, S), int targets (B, S).
    B, C, S = 2, 16, 8
    key = jax.random.PRNGKey(0)
    k1, k2 = jax.random.split(key)
    logits = jax.random.normal(k1, (B, C, S), dtype=jnp.float32)
    targets = jax.random.randint(k2, (B, S), 0, C, dtype=jnp.int32)

    loss = combined_loss(logits, targets)
    jax.block_until_ready(loss)

    ref = _reference(logits, targets)
    assert jnp.allclose(loss, ref, rtol=1e-5, atol=1e-5), (loss, ref)

    print("KERNEL_OK")
</pallas_src>

<mosaic_0001>
module attributes {stable_mosaic.version = 11 : i64} {
  func.func @_combined_loss_kernel(%arg0: i32, %arg1: i32, %arg2: memref<1x16x8xf32, #tpu.memory_space<vmem>>, %arg3: memref<1x1x8xi32, #tpu.memory_space<vmem>>, %arg4: memref<1x1x1xf32, #tpu.memory_space<vmem>>, %arg5: memref<1x8xf32, #tpu.memory_space<vmem>>) attributes {dimension_semantics = [#tpu.dimension_semantics<parallel>, #tpu.dimension_semantics<arbitrary>], iteration_bounds = array<i64: 2, 1>, scalar_prefetch = 0 : i64, scratch_operands = 1 : i64, tpu.core_type = #tpu.core_type<tc>, window_params = [{transform_indices = @transform_0, window_bounds = array<i64: 1, 16, 8>}, {transform_indices = @transform_1, window_bounds = array<i64: 1, 1, 8>}, {transform_indices = @transform_2, window_bounds = array<i64: 1, 1, 1>}]} {
    %c0_i32 = arith.constant 0 : i32
    %0 = arith.cmpi eq, %arg1, %c0_i32 : i32
    %1 = arith.extui %0 : i1 to i32
    %c0_i32_0 = arith.constant 0 : i32
    %2 = arith.cmpi ne, %1, %c0_i32_0 : i32
    scf.if %2 {
      %cst_20 = arith.constant 0.000000e+00 : f32
      %45 = vector.broadcast %cst_20 : f32 to vector<1x8xf32>
      %c0_21 = arith.constant 0 : index
      %c0_22 = arith.constant 0 : index
      %46 = vector.load %arg5[%c0_21, %c0_22] : memref<1x8xf32, #tpu.memory_space<vmem>>, vector<1x8xf32>
      tpu.vector_store %arg5[%c0_21, %c0_22], %45 {strides = array<i32>} : memref<1x8xf32, #tpu.memory_space<vmem>>, vector<1x8xf32>,
    } else {
    }
    %c0 = arith.constant 0 : index
    %c0_1 = arith.constant 0 : index
    %c0_2 = arith.constant 0 : index
    %3 = vector.load %arg2[%c0, %c0_1, %c0_2] : memref<1x16x8xf32, #tpu.memory_space<vmem>>, vector<1x16x8xf32>
    %4 = vector.shape_cast %3 : vector<1x16x8xf32> to vector<16x8xf32>
    %c0_3 = arith.constant 0 : index
    %c0_4 = arith.constant 0 : index
    %c0_5 = arith.constant 0 : index
    %5 = vector.load %arg3[%c0_3, %c0_4, %c0_5] : memref<1x1x8xi32, #tpu.memory_space<vmem>>, vector<1x1x8xi32>
    %6 = vector.shape_cast %5 : vector<1x1x8xi32> to vector<1x8xi32>
    %7 = tpu.iota {dimensions = array<i32: 1>} : vector<1x8xi32>
    %c8_i32 = arith.constant 8 : i32
    %8 = arith.muli %arg1, %c8_i32 : i32
    %9 = vector.broadcast %8 : i32 to vector<1x8xi32>
    %10 = arith.addi %9, %7 : vector<1x8xi32>
    %c8_i32_6 = arith.constant 8 : i32
    %11 = vector.broadcast %c8_i32_6 : i32 to vector<1x8xi32>
    %12 = arith.cmpi slt, %10, %11 : vector<1x8xi32>
    %13 = tpu.iota {dimensions = array<i32: 0>} : vector<16x8xi32>
    %14 = vector.broadcast %6 : vector<1x8xi32> to vector<16x8xi32>
    %15 = arith.cmpi eq, %13, %14 : vector<16x8xi32>
    %cst = arith.constant 0.000000e+00 : f32
    %16 = vector.broadcast %cst : f32 to vector<16x8xf32>
    %17 = arith.select %15, %4, %16 : vector<16x8xi1>, vector<16x8xf32>
    %cst_7 = arith.constant dense<0.000000e+00> : vector<8xf32>
    %18 = vector.multi_reduction <add>, %17, %cst_7 [0] : vector<16x8xf32> to vector<8xf32>
    %19 = vector.shape_cast %18 : vector<8xf32> to vector<1x8xf32>
    %cst_8 = arith.constant dense<0xFF800000> : vector<8xf32>
    %20 = vector.multi_reduction <maximumf>, %4, %cst_8 [0] : vector<16x8xf32> to vector<8xf32>
    %21 = vector.shape_cast %20 : vector<8xf32> to vector<1x8xf32>
    %22 = vector.broadcast %21 : vector<1x8xf32> to vector<16x8xf32>
    %23 = arith.subf %4, %22 : vector<16x8xf32>
    %24 = math.exp %23 : vector<16x8xf32>
    %cst_9 = arith.constant dense<0.000000e+00> : vector<8xf32>
    %25 = vector.multi_reduction <add>, %24, %cst_9 [0] : vector<16x8xf32> to vector<8xf32>
    %26 = vector.shape_cast %25 : vector<8xf32> to vector<1x8xf32>
    %27 = math.log %26 : vector<1x8xf32>
    %28 = arith.addf %21, %27 : vector<1x8xf32>
    %29 = arith.subf %28, %19 : vector<1x8xf32>
    %cst_10 = arith.constant 0.699999988 : f32
    %30 = vector.broadcast %cst_10 : f32 to vector<1x8xf32>
    %31 = arith.mulf %30, %29 : vector<1x8xf32>
    %cst_11 = arith.constant 0.000000e+00 : f32
    %32 = vector.broadcast %cst_11 : f32 to vector<1x8xf32>
    %33 = arith.subf %32, %19 : vector<1x8xf32>
    %cst_12 = arith.constant 3.000000e-01 : f32
    %34 = vector.broadcast %cst_12 : f32 to vector<1x8xf32>
    %35 = arith.mulf %34, %33 : vector<1x8xf32>
    %36 = arith.addf %31, %35 : vector<1x8xf32>
    %c0_13 = arith.constant 0 : index
    %c0_14 = arith.constant 0 : index
    %37 = vector.load %arg5[%c0_13, %c0_14] : memref<1x8xf32, #tpu.memory_space<vmem>>, vector<1x8xf32>
    %cst_15 = arith.constant 0.000000e+00 : f32
    %38 = vector.broadcast %cst_15 : f32 to vector<1x8xf32>
    %39 = arith.select %12, %36, %38 : vector<1x8xi1>, vector<1x8xf32>
    %40 = arith.addf %37, %39 : vector<1x8xf32>
    %c0_16 = arith.constant 0 : index
    %c0_17 = arith.constant 0 : index
    %41 = vector.load %arg5[%c0_16, %c0_17] : memref<1x8xf32, #tpu.memory_space<vmem>>, vector<1x8xf32>
    tpu.vector_store %arg5[%c0_16, %c0_17], %40 {strides = array<i32>} : memref<1x8xf32, #tpu.memory_space<vmem>>, vector<1x8xf32>,
    %c0_i32_18 = arith.constant 0 : i32
    %42 = arith.cmpi eq, %arg1, %c0_i32_18 : i32
    %43 = arith.extui %42 : i1 to i32
    %c0_i32_19 = arith.constant 0 : i32
    %44 = arith.cmpi ne, %43, %c0_i32_19 : i32
    scf.if %44 {
      %c0_20 = arith.constant 0 : index
      %c0_21 = arith.constant 0 : index
      %45 = vector.load %arg5[%c0_20, %c0_21] : memref<1x8xf32, #tpu.memory_space<vmem>>, vector<1x8xf32>
      %cst_22 = arith.constant dense<0.000000e+00> : vector<1xf32>
      %46 = vector.multi_reduction <add>, %45, %cst_22 [1] : vector<1x8xf32> to vector<1xf32>
      %47 = vector.shape_cast %46 : vector<1xf32> to vector<1x1xf32>
      %c0_23 = arith.constant 0 : index
      %c0_24 = arith.constant 0 : index
      %c0_25 = arith.constant 0 : index
      %48 = vector.load %arg4[%c0_23, %c0_24, %c0_25] : memref<1x1x1xf32, #tpu.memory_space<vmem>>, vector<1x1x1xf32>
      %49 = vector.shape_cast %48 : vector<1x1x1xf32> to vector<1x1xf32>
      %50 = vector.shape_cast %47 : vector<1x1xf32> to vector<1x1x1xf32>
      tpu.vector_store %arg4[%c0_23, %c0_24, %c0_25], %50 {strides = array<i32>} : memref<1x1x1xf32, #tpu.memory_space<vmem>>, vector<1x1x1xf32>,
    } else {
    }
    return
  }
  func.func @transform_0(%arg0: i32, %arg1: i32) -> (i32, i32, i32) {
    %c0_i32 = arith.constant 0 : i32
    %c0_i32_0 = arith.constant 0 : i32
    return %arg0, %c0_i32, %arg1 : i32, i32, i32
  }
  func.func @transform_1(%arg0: i32, %arg1: i32) -> (i32, i32, i32) {
    %c0_i32 = arith.constant 0 : i32
    %c0_i32_0 = arith.constant 0 : i32
    return %arg0, %c0_i32, %arg1 : i32, i32, i32
  }
  func.func @transform_2(%arg0: i32, %arg1: i32) -> (i32, i32, i32) {
    %c0_i32 = arith.constant 0 : i32
    %c0_i32_0 = arith.constant 0 : i32
    %c0_i32_1 = arith.constant 0 : i32
    return %arg0, %c0_i32, %c0_i32_0 : i32, i32, i32
  }
}

</mosaic_0001>

<llo_original>
// kernel: tpu_custom_call.1
$region0: #{tpu_custom_call.1}
  #allocation0 [shape = 'u32[]', space=smem, size = 0x4, offset = 0x4, fixed_abs, tag = 'smem constant byte address 0x4 - core index']
  #allocation1 [shape = 'u32[144,128]{1,0:T(1,128)}', space=vmem, size = 0x12000, scoped, tag = 'internal scratch']
  #allocation2 [shape = 'f32[1,8]{1,0:T(1,128)}', space=vmem, size = 0x200, scoped, tag = 'scratch operand']
  %s0 = inlined_call_operand.vmem [shape: f32[2,16,8], index: 0, kind: input, shape index: {}]
  %s1 = inlined_call_operand.vmem [shape: s32[2,1,8], index: 1, kind: input, shape index: {}]
  %s2 = inlined_call_operand.vmem [shape: f32[2,1,1], index: 2, kind: output, shape index: {}]
  %s3 = sld [smem:[#allocation0]]
  $region49: #{tpu_custom_call.1} parent=0
    _
  %s5 = ssub.s32 1, %s3
  %s6 = scalar_select 0, %s5, %s3
  loop: start=0, step=1, limit=4
  $region2: #{tpu_custom_call.1} parent=0 // loop_pre_header
    _
  $region3: #{tpu_custom_call.1} parent=0 // loop_header
    %s8 = sphi 0, %s12
    %p9 = scmp.ge.s32.totalorder %s8, 4
    %s15 = sphi 0, %s27
    %s16 = sphi 0, %s23
    %s17 = sphi 0, %s15
    %s18 = sphi 0, %s16
    %s19 = sphi 0, %s17
    %s20 = sphi 0, %s18
    %s32 = sphi 0, %s34
    %s35 = sphi 0, %s32
    %s36 = sphi 0, %s35
    %s52 = sphi 0, %s36
    %s60 = sphi 0, %s62
    %s63 = sphi 0, %s60
    %s64 = sphi 0, %s63
    %s80 = sphi 0, %s64
    %s86 = sphi 0, %s88
    %s89 = sphi 0, %s86
    %s90 = sphi 0, %s89
    %s106 = sphi 0, %s90
  $region4: #{tpu_custom_call.1} parent=0 // loop_header_branch
    %11 = sbr.rel (%p9) target = $region8
  $region5: #{tpu_custom_call.1} parent=0 // loop_body
    %s13 = ssub.s32 %s8, 1
    %s14 = ssub.s32 %s8, 2
    %s21 = sadd.s32 1, %s16
    %p22 = scmp.ge.s32.totalorder %s21, 1
    %s23 = scalar_select %p22, 0, %s21
    %s24 = sadd.s32 1, %s15
    %s25 = scalar_select %p22, %s24, %s15
    %p26 = scmp.ge.s32.totalorder %s25, 2
    %s27 = scalar_select %p26, 0, %s25
    %s28 = ssub.s32 %s15, %s27
    %s29 = ssub.s32 %s16, %s23
    %s30 = sor.u32 %s28, %s29
    %p31 = scmp.eq.s32.totalorder %s30, 0
    %s33 = sadd.s32 %s32, 1
    %s34 = scalar_select %p31, %s32, %s33
    %p37 = pneg %p31
    %p38 = scmp.eq.s32.totalorder %s8, 1
    %p39 = por %p37, %p38
    %p40 = scmp.ne.s32.totalorder %s32, %s35
    %p41 = scmp.eq.s32.totalorder %s8, 0
    %p42 = por %p40, %p41
    %p43 = scmp.ne.s32.totalorder %s32, %s35
    %p44 = scmp.eq.s32.totalorder %s13, 1
    %p45 = por %p43, %p44
    %p46 = scmp.ne.s32.totalorder %s35, %s36
    %p47 = scmp.eq.s32.totalorder %s13, 0
    %p48 = por %p46, %p47
    %p49 = scmp.ne.s32.totalorder %s35, %s36
    %p50 = scmp.eq.s32.totalorder %s14, 1
    %p51 = por %p49, %p50
    %p53 = scmp.ne.s32.totalorder %s36, %s52
    %p54 = scmp.eq.s32.totalorder %s14, 0
    %p55 = por %p53, %p54
    %s56 = ssub.s32 %s15, %s27
    %s57 = ssub.s32 %s16, %s23
    %s58 = sor.u32 %s56, %s57
    %p59 = scmp.eq.s32.totalorder %s58, 0
    %s61 = sadd.s32 %s60, 1
    %s62 = scalar_select %p59, %s60, %s61
    %p65 = pneg %p59
    %p66 = scmp.eq.s32.totalorder %s8, 1
    %p67 = por %p65, %p66
    %p68 = scmp.ne.s32.totalorder %s60, %s63
    %p69 = scmp.eq.s32.totalorder %s8, 0
    %p70 = por %p68, %p69
    %p71 = scmp.ne.s32.totalorder %s60, %s63
    %p72 = scmp.eq.s32.totalorder %s13, 1
    %p73 = por %p71, %p72
    %p74 = scmp.ne.s32.totalorder %s63, %s64
    %p75 = scmp.eq.s32.totalorder %s13, 0
    %p76 = por %p74, %p75
    %p77 = scmp.ne.s32.totalorder %s63, %s64
    %p78 = scmp.eq.s32.totalorder %s14, 1
    %p79 = por %p77, %p78
    %p81 = scmp.ne.s32.totalorder %s64, %s80
    %p82 = scmp.eq.s32.totalorder %s14, 0
    %p83 = por %p81, %p82
    %s84 = ssub.s32 %s15, %s27
    %p85 = scmp.eq.s32.totalorder %s84, 0
    %s87 = sadd.s32 %s86, 1
    %s88 = scalar_select %p85, %s86, %s87
    %p91 = pneg %p85
    %p92 = scmp.eq.s32.totalorder %s8, 1
    %p93 = por %p91, %p92
    %p94 = scmp.ne.s32.totalorder %s86, %s89
    %p95 = scmp.eq.s32.totalorder %s8, 0
    %p96 = por %p94, %p95
    %p97 = scmp.ne.s32.totalorder %s86, %s89
    %p98 = scmp.eq.s32.totalorder %s13, 1
    %p99 = por %p97, %p98
    %p100 = scmp.ne.s32.totalorder %s89, %s90
    %p101 = scmp.eq.s32.totalorder %s13, 0
    %p102 = por %p100, %p101
    %p103 = scmp.ne.s32.totalorder %s89, %s90
    %p104 = scmp.eq.s32.totalorder %s14, 1
    %p105 = por %p103, %p104
    %p107 = scmp.ne.s32.totalorder %s90, %s106
    %p108 = scmp.eq.s32.totalorder %s14, 0
    %p109 = por %p107, %p108
    %p110 = scmp.le.s32.totalorder 1, %s8
    %p111 = scmp.lt.s32.totalorder %s8, 3
    %p112 = pnand %p110, %p111
    %p113 = pneg %p112
    // Predicated region
    $region9: #{tpu_custom_call.1} parent=5 // pred_check
      _
    $region10: #{tpu_custom_call.1} parent=5 // pred_check_branch
      %115 = sbr.rel (%p112) target = $region12
    $region11: #{tpu_custom_call.1} parent=5 // pred_region
      %s116 = ssub.s32 %s8, 1
    $region12: #{tpu_custom_call.1} parent=5 // pred_fallthru
      _
    %p117 = scmp.lt.s32.totalorder %s8, 2
    // Predicated region
    $region13: #{tpu_custom_call.1} parent=5 // pred_check
      %p118 = pneg %p117
    $region14: #{tpu_custom_call.1} parent=5 // pred_check_branch
      %120 = sbr.rel (%p118) target = $region16
    $region15: #{tpu_custom_call.1} parent=5 // pred_region
      // Predicated region
      $region17: #{tpu_custom_call.1} parent=15 // pred_check
        %p121 = pneg %p42
      $region18: #{tpu_custom_call.1} parent=15 // pred_check_branch
        %123 = sbr.rel (%p121) target = $region20
      $region19: #{tpu_custom_call.1} parent=15 // pred_region
        %p124 = scmp.lt.s32.totalorder %s15, 1
        %s125 = scalar_select %p124, %s15, 1
        %p126 = scmp.lt.s32.totalorder %s16, 0
        %s127 = scalar_select %p126, %s16, 0
        %s128 = smul.addr %s125, 2
        %s129 = sadd.s32 %s127, %s128
        %s130 = smul.addr %s129, 8
        %s131 = scalar_lea.vmem %s0, %s130
      $region20: #{tpu_custom_call.1} parent=15 // pred_fallthru
        _
      // Predicated region
      $region21: #{tpu_custom_call.1} parent=15 // pred_check
        %p132 = pneg %p70
      $region22: #{tpu_custom_call.1} parent=15 // pred_check_branch
        %134 = sbr.rel (%p132) target = $region24
      $region23: #{tpu_custom_call.1} parent=15 // pred_region
        %p135 = scmp.lt.s32.totalorder %s15, 1
        %s136 = scalar_select %p135, %s15, 1
        %p137 = scmp.lt.s32.totalorder %s16, 0
        %s138 = scalar_select %p137, %s16, 0
        %s139 = sadd.s32 %s138, %s136
        %s140 = scalar_lea.vmem %s1, %s139
      $region24: #{tpu_custom_call.1} parent=15 // pred_fallthru
        _
    $region16: #{tpu_custom_call.1} parent=5 // pred_fallthru
      _
    %p141 = scmp.le.s32.totalorder 1, %s8
    %p142 = scmp.lt.s32.totalorder %s8, 3
    %p143 = pnand %p141, %p142
    %p144 = pneg %p143
    // Predicated region
    $region25: #{tpu_custom_call.1} parent=5 // pred_check
      _
    $region26: #{tpu_custom_call.1} parent=5 // pred_check_branch
      %146 = sbr.rel (%p143) target = $region28
    $region27: #{tpu_custom_call.1} parent=5 // pred_region
      %s147 = ssub.s32 %s8, 1
      %p148 = scmp.lt.s32.totalorder %s17, 1
      %s149 = scalar_select %p148, %s17, 1
      %p150 = scmp.lt.s32.totalorder %s18, 0
      %s151 = scalar_select %p150, %s18, 0
      %s152 = smul.addr %s149, 2
      %s153 = sadd.s32 %s151, %s152
      %s154 = smul.addr %s153, 8
      %s155 = scalar_lea.vmem %s0, %s154
      %p156 = pneg %p48
      %p157 = pneg %p45
      %p158 = scmp.lt.s32.totalorder %s17, 1
      %s159 = scalar_select %p158, %s17, 1
      %p160 = scmp.lt.s32.totalorder %s18, 0
      %s161 = scalar_select %p160, %s18, 0
      %s162 = sadd.s32 %s161, %s159
      %s163 = scalar_lea.vmem %s1, %s162
      %p164 = pneg %p76
      %p165 = pneg %p73
      %p166 = pneg %p102
      %p167 = pneg %p99
      %p168 = scmp.lt.s32.totalorder %s17, 1
      %s169 = scalar_select %p168, %s17, 1
      %s170 = scalar_lea.vmem %s2, %s169
      %p171 = scmp.lt.s32.totalorder %s17, 1
      %s172 = scalar_select %p171, %s17, 1
      %p173 = scmp.lt.s32.totalorder %s18, 0
      %s174 = scalar_select %p173, %s18, 0
      %s175 = smul.addr %s172, 2
      %s176 = sadd.s32 %s174, %s175
      %s177 = smul.addr %s176, 8
      %s178 = scalar_lea.vmem %s0, %s177
      %p179 = scmp.lt.s32.totalorder %s17, 1
      %s180 = scalar_select %p179, %s17, 1
      %p181 = scmp.lt.s32.totalorder %s18, 0
      %s182 = scalar_select %p181, %s18, 0
      %s183 = sadd.s32 %s182, %s180
      %s184 = scalar_lea.vmem %s1, %s183
      %p185 = scmp.lt.s32.totalorder %s17, 1
      %s186 = scalar_select %p185, %s17, 1
      %s187 = scalar_lea.vmem %s2, %s186
      %p188 = scmp.eq.s32.totalorder %s18, 0
      // Predicated region
      $region29: #{tpu_custom_call.1} parent=27 // pred_check
        %p189 = pneg %p188
      $region30: #{tpu_custom_call.1} parent=27 // pred_check_branch
        %191 = sbr.rel (%p189) target = $region32
      $region31: #{tpu_custom_call.1} parent=27 // pred_region
        %vm192 = vcmask 57344
        %193 = vst.msk [vmem:[#allocation2] sm:$0x1] %vm192, 0.0
      $region32: #{tpu_custom_call.1} parent=27 // pred_fallthru
        _
      %v194 = vld [vmem:[%s178] sm:$0xff]
      %v195 = vld [vmem:[%s178 + $0x8] sm:$0xff]
      %v196 = vld [vmem:[%s184] sm:$0x1]
      %v197 = vlaneseq
      %v198 = vand.u32 %v197, 127
      %s199 = smul.u32 %s18, 8
      %v200 = vstv %s199
      %v201 = vadd.s32 %v200, %v198
      %vm202 = vcmp.lt.s32.totalorder %v201, 8
      %v203 = vlaneseq
      %v204 = vshrl.u32 %v203, 7
      %v205 = vadd.s32 %v204, 8
      %v206 = vlaneseq
      %v207 = vshrl.u32 %v206, 7
      %v208 = vsub.s32 0, %v207
      %v209 = vrot.slane %v196, %v208
      %vm210 = vcmp.eq.s32.totalorder %v204, %v209
      %vm211 = vcmp.eq.s32.totalorder %v205, %v209
      %v212 = vsel %vm210, %v194, 0.0
      %v213 = vsel %vm211, %v195, 0.0
      %vm214 = vcmask 64512
      %v215 = vsel %vm214, %v212, 0.0
      %v216 = vsel %vm214, %v213, 0.0
      %v217 = vadd.f32 %v215, %v216
      %v218 = vrot.slane %v217, 4
      %v219 = vadd.f32 %v217, %v218
      %v220 = vrot.slane %v219, 2
      %v221 = vadd.f32 %v219, %v220
      %v222 = vrot.slane %v221, 1
      %v223 = vadd.f32 %v221, %v222
      %v224 = vsel %vm214, %v194, -inf
      %v225 = vsel %vm214, %v195, -inf
      %v226 = vmax.f32 %v224, %v225
      %v227 = vrot.slane %v226, 4
      %v228 = vmax.f32 %v226, %v227
      %v229 = vrot.slane %v228, 2
      %v230 = vmax.f32 %v228, %v229
      %v231 = vrot.slane %v230, 1
      %v232 = vmax.f32 %v230, %v231
      %v233 = vsub.f32 %v194, %v232
      %v234 = vsub.f32 %v195, %v232
      %v235 = vmul.f32 %v233, 1.442695
      %v236 = vpow.pop %v235
      %v237 = vmul.f32 %v234, 1.442695
      %v238 = vpow.pop %v237
      %v239 = vsel %vm214, %v236, 0.0
      %v240 = vsel %vm214, %v238, 0.0
      %v241 = vadd.f32 %v239, %v240
      %v242 = vrot.slane %v241, 4
      %v243 = vadd.f32 %v241, %v242
      %v244 = vrot.slane %v243, 2
      %v245 = vadd.f32 %v243, %v244
      %v246 = vrot.slane %v245, 1
      %v247 = vadd.f32 %v245, %v246
      %v248 = vlog2.pop %v247
      %v249 = vmul.f32 %v248, 0.6931472
      %v250 = vadd.f32 %v232, %v249
      %v251 = vsub.f32 %v250, %v223
      %v252 = vmul.f32 %v251, 0.7
      %v253 = vsub.f32 0.0, %v223
      %v254 = vmul.f32 %v253, 0.3
      %v255 = vadd.f32 %v252, %v254
      %v256 = vld [vmem:[#allocation2] sm:$0x1]
      %v257 = vsel %vm202, %v255, 0.0
      %v258 = vadd.f32 %v256, %v257
      %vm259 = vcmask 57344
      %260 = vst.msk [vmem:[#allocation2] sm:$0x1] %vm259, %v258
      // Predicated region
      $region33: #{tpu_custom_call.1} parent=27 // pred_check
        %p261 = pneg %p188
      $region34: #{tpu_custom_call.1} parent=27 // pred_check_branch
        %263 = sbr.rel (%p261) target = $region36
      $region35: #{tpu_custom_call.1} parent=27 // pred_region
        %v264 = vld [vmem:[#allocation2] sm:$0x1]
        %v265 = vsel %vm259, %v264, 0.0
        %266 = vadd.xlane.f32.xlu0 %v265
        %v267 = vpop.xlane.xlu0 %266
        %vm268 = vcmask 0
        %269 = vst.msk [vmem:[%s187] sm:$0x1] %vm268, %v267
      $region36: #{tpu_custom_call.1} parent=27 // pred_fallthru
        _
      %p270 = scmp.lt.s32.totalorder %s17, 1
      %s271 = scalar_select %p270, %s17, 1
      %s272 = scalar_lea.vmem %s2, %s271
      // Predicated region
      $region37: #{tpu_custom_call.1} parent=27 // pred_check
        %p273 = pneg %p99
      $region38: #{tpu_custom_call.1} parent=27 // pred_check_branch
        %275 = sbr.rel (%p273) target = $region40
      $region39: #{tpu_custom_call.1} parent=27 // pred_region
        _
      $region40: #{tpu_custom_call.1} parent=27 // pred_fallthru
        _
    $region28: #{tpu_custom_call.1} parent=5 // pred_fallthru
      _
    %p276 = scmp.le.s32.totalorder 2, %s8
    // Predicated region
    $region41: #{tpu_custom_call.1} parent=5 // pred_check
      %p277 = pneg %p276
    $region42: #{tpu_custom_call.1} parent=5 // pred_check_branch
      %279 = sbr.rel (%p277) target = $region44
    $region43: #{tpu_custom_call.1} parent=5 // pred_region
      %s280 = ssub.s32 %s8, 2
      // Predicated region
      $region45: #{tpu_custom_call.1} parent=43 // pred_check
        %p281 = pneg %p105
      $region46: #{tpu_custom_call.1} parent=43 // pred_check_branch
        %283 = sbr.rel (%p281) target = $region48
      $region47: #{tpu_custom_call.1} parent=43 // pred_region
        %p284 = scmp.lt.s32.totalorder %s19, 1
        %s285 = scalar_select %p284, %s19, 1
        %s286 = scalar_lea.vmem %s2, %s285
      $region48: #{tpu_custom_call.1} parent=43 // pred_fallthru
        _
    $region44: #{tpu_custom_call.1} parent=5 // pred_fallthru
      _
  $region6: #{tpu_custom_call.1} parent=0 // loop_footer
    %s12 = sadd.s32 1, %s8
  $region7: #{tpu_custom_call.1} parent=0 // loop_footer_branch
    %7 = sbr.rel target = $region3
  $region8: #{tpu_custom_call.1} parent=0 // loop_exit
    _

</llo_original>
